<compile_context>
chip_gen: v5e
topology: v5e:2x2
jax: 0.10.0
libtpu: 0.0.40
codegen_flags: <defaults>
</compile_context>

<pallas_src>
import jax
import jax.numpy as jnp
from jax.experimental import pallas as pl
from jax.experimental.pallas import tpu as pltpu

input_dim = 1
output_dim = 1

_LANE = 128            # vreg lane width
_SUBLANE = 8           # vreg sublane count (f32)
_TILE_ROWS = 4096      # rows of 128 lanes per grid step -> 2 MiB f32 tile
_FALLBACK_ELEMS = 1 << 16  # below this, plain XLA elementwise is cheaper


def _round_up(v, m):
    return ((v + m - 1) // m) * m


def _fma_kernel(w_ref, b_ref, x_ref, o_ref):
    # w_ref / b_ref: (1,) scalars in SMEM; x_ref / o_ref: (tile_rows, 128)
    # lane-dense VMEM tiles.  Pure VPU multiply-add.
    o_ref[...] = x_ref[...] * w_ref[0] + b_ref[0]


def linear_regression_forward(x, weight, bias, *, force_kernel=False):
    """x: [B, 1], weight: [1, 1], bias: [1] -> [B, 1]."""
    B, d_in = x.shape
    d_out = weight.shape[0]
    assert d_in == 1 and d_out == 1, "kernel is specialized to Linear(1, 1)"

    w1d = weight.reshape(1)
    b1d = bias.reshape(1)

    # Small-batch fallback: launch + pad/reshape/slice overhead would dominate.
    if not force_kernel and B < _FALLBACK_ELEMS:
        return (x * w1d[0] + b1d[0]).reshape(B, d_out)

    # Lane-dense layout: flatten batch, view as [rows, 128].
    rows = pl.cdiv(B, _LANE)
    rows_pad = _round_up(rows, _SUBLANE)      # sublane multiple only

    # Tile sizing: large streaming tiles, but guarantee >= 2 tiles when there
    # are enough rows so the "parallel" axis can shard across both TCs (v7x).
    if rows_pad >= 2 * _SUBLANE:
        half = _round_up(pl.cdiv(rows_pad, 2), _SUBLANE)
        tile_rows = min(_TILE_ROWS, half)
    else:
        tile_rows = rows_pad
    num_tiles = pl.cdiv(rows_pad, tile_rows)  # partial final block is masked

    pad = rows_pad * _LANE - B
    x_flat = x.reshape(-1)
    if pad:  # only when B is not already a multiple of 8*128
        x_flat = jnp.pad(x_flat, (0, pad))
    x2d = x_flat.reshape(rows_pad, _LANE)

    out2d = pl.pallas_call(
        _fma_kernel,
        out_shape=jax.ShapeDtypeStruct((rows_pad, _LANE), x.dtype),
        grid=(num_tiles,),
        in_specs=[
            pl.BlockSpec(memory_space=pltpu.MemorySpace.SMEM),   # weight scalar
            pl.BlockSpec(memory_space=pltpu.MemorySpace.SMEM),   # bias scalar
            pl.BlockSpec((tile_rows, _LANE), lambda i: (i, 0)),  # x tile
        ],
        out_specs=pl.BlockSpec((tile_rows, _LANE), lambda i: (i, 0)),
        compiler_params=pltpu.CompilerParams(
            dimension_semantics=("parallel",),
        ),
    )(w1d, b1d, x2d)

    # Drop lane padding (only when padding was added) and restore [B, 1].
    out_flat = out2d.reshape(-1)
    if pad:
        out_flat = out_flat[:B]
    return out_flat.reshape(B, d_out)


if __name__ == "__main__":
    key = jax.random.PRNGKey(0)
    kx, kw, kb = jax.random.split(key, 3)

    # Deterministic synthetic params (shapes from nn.Linear(1, 1)).
    weight = jax.random.uniform(
        kw, (output_dim, input_dim), dtype=jnp.float32, minval=-1.0, maxval=1.0
    )
    bias = jax.random.uniform(
        kb, (output_dim,), dtype=jnp.float32, minval=-1.0, maxval=1.0
    )

    # 1) batch=8 forced through the Pallas kernel (single 8x128 tile)
    # 2) ragged batch=4099 forced through the kernel (pad + 2 tiles + masked
    #    partial final block — exercises the multi-TC / edge-block path)
    # 3) batch=16 through the small-batch XLA fallback
    for batch, force in ((8, True), (4099, True), (16, False)):
        x = jax.random.normal(kx, (batch, input_dim), dtype=jnp.float32)
        out = linear_regression_forward(x, weight, bias, force_kernel=force)
        out = jax.block_until_ready(out)

        ref = x @ weight.T + bias
        assert out.shape == (batch, output_dim)
        assert jnp.allclose(out, ref, atol=1e-5, rtol=1e-5), (batch, force)

    print("KERNEL_OK")
</pallas_src>

<mosaic_0001>
module attributes {stable_mosaic.version = 11 : i64} {
  func.func @_fma_kernel(%arg0: i32, %arg1: memref<1xf32, #tpu.memory_space<smem>>, %arg2: memref<1xf32, #tpu.memory_space<smem>>, %arg3: memref<8x128xf32, #tpu.memory_space<vmem>>, %arg4: memref<8x128xf32, #tpu.memory_space<vmem>>) attributes {dimension_semantics = [#tpu.dimension_semantics<parallel>], iteration_bounds = array<i64: 1>, scalar_prefetch = 0 : i64, scratch_operands = 0 : i64, tpu.core_type = #tpu.core_type<tc>, window_params = [{transform_indices = @transform_0, window_bounds = array<i64: 1>}, {transform_indices = @transform_1, window_bounds = array<i64: 1>}, {transform_indices = @transform_2, window_bounds = array<i64: 8, 128>}, {transform_indices = @transform_3, window_bounds = array<i64: 8, 128>}]} {
    %c0 = arith.constant 0 : index
    %c0_0 = arith.constant 0 : index
    %0 = vector.load %arg3[%c0, %c0_0] : memref<8x128xf32, #tpu.memory_space<vmem>>, vector<8x128xf32>
    %c0_1 = arith.constant 0 : index
    %1 = memref.load %arg1[%c0_1] : memref<1xf32, #tpu.memory_space<smem>>
    %2 = vector.broadcast %1 : f32 to vector<8x128xf32>
    %3 = arith.mulf %0, %2 : vector<8x128xf32>
    %c0_2 = arith.constant 0 : index
    %4 = memref.load %arg2[%c0_2] : memref<1xf32, #tpu.memory_space<smem>>
    %5 = vector.broadcast %4 : f32 to vector<8x128xf32>
    %6 = arith.addf %3, %5 : vector<8x128xf32>
    %c0_3 = arith.constant 0 : index
    %c0_4 = arith.constant 0 : index
    %7 = vector.load %arg4[%c0_3, %c0_4] : memref<8x128xf32, #tpu.memory_space<vmem>>, vector<8x128xf32>
    tpu.vector_store %arg4[%c0_3, %c0_4], %6 {strides = array<i32>} : memref<8x128xf32, #tpu.memory_space<vmem>>, vector<8x128xf32>,
    return
  }
  func.func @transform_0(%arg0: i32) -> i32 {
    %c0_i32 = arith.constant 0 : i32
    %c0_i32_0 = arith.constant 0 : i32
    return %c0_i32 : i32
  }
  func.func @transform_1(%arg0: i32) -> i32 {
    %c0_i32 = arith.constant 0 : i32
    %c0_i32_0 = arith.constant 0 : i32
    return %c0_i32 : i32
  }
  func.func @transform_2(%arg0: i32) -> (i32, i32) {
    %c0_i32 = arith.constant 0 : i32
    %c0_i32_0 = arith.constant 0 : i32
    return %arg0, %c0_i32 : i32, i32
  }
  func.func @transform_3(%arg0: i32) -> (i32, i32) {
    %c0_i32 = arith.constant 0 : i32
    %c0_i32_0 = arith.constant 0 : i32
    return %arg0, %c0_i32 : i32, i32
  }
}

</mosaic_0001>

<llo_original>
// kernel: tpu_custom_call.1
$region0: #{tpu_custom_call.1}
  #allocation0 [shape = 'u32[]', space=smem, size = 0x4, offset = 0x4, fixed_abs, tag = 'smem constant byte address 0x4 - core index']
  #allocation1 [shape = 'u32[72,128]{1,0:T(1,128)}', space=vmem, size = 0x9000, scoped, tag = 'internal scratch']
  #allocation2 [shape = 'f32[1]{0:T(128)S(6)}', space=smem, size = 0x200, scoped, tag = 'scoped memory for tpu_custom_call.1']
  #allocation3 [shape = 'f32[1]{0:T(128)S(6)}', space=smem, size = 0x200, scoped, tag = 'scoped memory for tpu_custom_call.1']
  %s0 = inlined_call_operand.<no memory space> [shape: f32[1], index: 0, kind: input, shape index: {}]
  %s1 = inlined_call_operand.<no memory space> [shape: f32[1], index: 1, kind: input, shape index: {}]
  %s2 = inlined_call_operand.hbm [shape: f32[8,128], index: 2, kind: input, shape index: {}]
  %s3 = inlined_call_operand.hbm [shape: f32[8,128], index: 3, kind: output, shape index: {}]
  %s4 = sld [smem:[#allocation0]]
  $region26: #{tpu_custom_call.1} parent=0
    _
  %s6 = ssub.s32 1, %s4
  %s7 = scalar_select 0, %s6, %s4
  %8 = sst [smem:[#allocation2]] %s0
  %9 = sst [smem:[#allocation3]] %s1
  $region1: #{tpu_custom_call.1} parent=0
    #allocation4 [shape = 'u8[4096]{0}', space=vmem, size = 0x1000, scoped, tag = 'input window, operand 2, single buffered']
    #allocation5 [shape = 's32[1]{0}', space=sflag, size = 0x4, scoped, tag = 'scoped memory for tpu_custom_call.1']
    #allocation6 [shape = 's32[1]{0}', space=sflag, size = 0x4, scoped, tag = 'scoped memory for tpu_custom_call.1']
    #allocation7 [shape = 'u8[4096]{0}', space=vmem, size = 0x1000, scoped, tag = 'output window, operand 0, single buffered']
    %10 = vsyncpa [#allocation5], 0
    %11 = vsyncpa [#allocation6], 0
    // Predicated region
    $region2: #{tpu_custom_call.1} parent=1 // pred_check
      _
    $region3: #{tpu_custom_call.1} parent=1 // pred_check_branch
      %13 = sbr.rel (0) target = $region5
    $region4: #{tpu_custom_call.1} parent=1 // pred_region
      _
    $region5: #{tpu_custom_call.1} parent=1 // pred_fallthru
      _
    // Predicated region
    $region6: #{tpu_custom_call.1} parent=1 // pred_check
      _
    $region7: #{tpu_custom_call.1} parent=1 // pred_check_branch
      %15 = sbr.rel (0) target = $region9
    $region8: #{tpu_custom_call.1} parent=1 // pred_region
      _
    $region9: #{tpu_custom_call.1} parent=1 // pred_fallthru
      _
    // Predicated region
    $region10: #{tpu_custom_call.1} parent=1 // pred_check
      _
    $region11: #{tpu_custom_call.1} parent=1 // pred_check_branch
      %17 = sbr.rel (0) target = $region13
    $region12: #{tpu_custom_call.1} parent=1 // pred_region
      %19 = vsyncadd [#allocation5], 0
      %s21 = sshll.u32 %s2, 4
      %s22 = int_to_ptr.hbm [resolvable:$true] %s21
      %s23 = sshll.u32 [#allocation4], 4
      %s24 = int_to_ptr.vmem [resolvable:$true] %s23
      %26 = dma.hbm_to_vmem [thread:$0]  %s22, 128, %s24, [#allocation5]
    $region13: #{tpu_custom_call.1} parent=1 // pred_fallthru
      _
    // Predicated region
    $region14: #{tpu_custom_call.1} parent=1 // pred_check
      _
    $region15: #{tpu_custom_call.1} parent=1 // pred_check_branch
      %28 = sbr.rel (0) target = $region17
    $region16: #{tpu_custom_call.1} parent=1 // pred_region
      %30 = dma.done [#allocation5], 128
    $region17: #{tpu_custom_call.1} parent=1 // pred_fallthru
      _
    %v31 = vld [vmem:[#allocation4] sm:$0xff]
    %s32 = sld [smem:[#allocation2]]
    %v33 = vstv %s32
    %v34 = vmul.f32 %v31, %v33
    %s35 = sld [smem:[#allocation3]]
    %v36 = vstv %s35
    %v37 = vadd.f32 %v34, %v36
    %38 = vst [vmem:[#allocation7] sm:$0xff] %v37
    // Predicated region
    $region18: #{tpu_custom_call.1} parent=1 // pred_check
      _
    $region19: #{tpu_custom_call.1} parent=1 // pred_check_branch
      %40 = sbr.rel (0) target = $region21
    $region20: #{tpu_custom_call.1} parent=1 // pred_region
      %42 = vsyncadd [#allocation6], 0
      %s44 = sshll.u32 [#allocation7], 4
      %s45 = int_to_ptr.vmem [resolvable:$true] %s44
      %s46 = sshll.u32 %s3, 4
      %s47 = int_to_ptr.hbm [resolvable:$true] %s46
      %49 = dma.vmem_to_hbm [thread:$0]  %s45, 128, %s47, [#allocation6]
    $region21: #{tpu_custom_call.1} parent=1 // pred_fallthru
      _
    // Predicated region
    $region22: #{tpu_custom_call.1} parent=1 // pred_check
      _
    $region23: #{tpu_custom_call.1} parent=1 // pred_check_branch
      %51 = sbr.rel (0) target = $region25
    $region24: #{tpu_custom_call.1} parent=1 // pred_region
      %53 = dma.done [#allocation6], 128
    $region25: #{tpu_custom_call.1} parent=1 // pred_fallthru
      _
    %54 = vsyncpa [#allocation5], 1
    %55 = vsyncpa [#allocation6], 1

</llo_original>
